<compile_context>
chip_gen: v6e
topology: v6e:2x2x1
jax: 0.10.0
libtpu: 0.0.40
codegen_flags: <defaults>
</compile_context>

<pallas_src>
import functools

import jax
import jax.numpy as jnp
from jax.experimental import pallas as pl
from jax.experimental.pallas import tpu as pltpu


def _lm_criterion_kernel(inp_ref, tgt_ref, msk_ref, out_ref, *, n_rows):
    # inp_ref: (RT, V)  log-probs tile (original dtype, upcast here)
    # tgt_ref: (RT, 1)  int32 targets tile
    # msk_ref: (RT, 1)  float32 mask tile
    # out_ref: (1, 128) float32 per-block partial sum (lane-dense, broadcast)
    i = pl.program_id(0)

    logp = inp_ref[...].astype(jnp.float32)          # (RT, V)
    tgt = tgt_ref[...]                               # (RT, 1) int32
    msk = msk_ref[...].astype(jnp.float32)           # (RT, 1)

    rt, v = logp.shape

    # Row-validity mask for the (possibly partial) edge block: OOB rows read
    # unspecified VMEM, so they are *selected* to zero (no NaN propagation).
    row_ids = i * rt + jax.lax.broadcasted_iota(jnp.int32, (rt, 1), 0)
    valid = row_ids < n_rows                         # (RT, 1) bool

    # Gather-along-vocab: (1, V) iota broadcast against (RT, 1) targets,
    # select instead of one-hot multiply (fewer VPU ops, no int32 temporary).
    vocab_ids = jax.lax.broadcasted_iota(jnp.int32, (1, v), 1)
    selected = jnp.where(vocab_ids == tgt, logp, 0.0)          # (RT, V)
    per_row = jnp.sum(selected, axis=1, keepdims=True)         # (RT, 1) lane reduce
    contrib = jnp.where(valid, -per_row * msk, 0.0)            # (RT, 1)

    partial = jnp.sum(contrib, axis=0, keepdims=True)          # (1, 1)
    out_ref[...] = jnp.broadcast_to(partial, out_ref.shape)    # lane-dense store


def _pick_row_tile(n_pad_rows, vocab, itemsize,
                   target_bytes=2 * 1024 * 1024, max_rows=2048):
    """~2 MiB per (row_tile, V) block in the input's HBM dtype, multiple of 8."""
    rt = target_bytes // max(1, vocab * itemsize)
    rt = max(8, (rt // 8) * 8)
    rt = min(rt, max_rows)
    rt = min(rt, (n_pad_rows // 8) * 8)   # block rows must not exceed array rows
    return max(8, int(rt))


def language_model_criterion(inp, target, mask, *, row_tile=None):
    """Pallas equivalent of LanguageModelCriterion.forward."""
    B, T, V = inp.shape
    # Glue: slice target/mask to the input's time length, flatten to rows.
    target = target[:, :T].reshape(-1, 1).astype(jnp.int32)    # (N, 1)
    mask2d = mask[:, :T].reshape(-1, 1).astype(jnp.float32)    # (N, 1)
    inp2d = inp.reshape(-1, V)          # keep original HBM dtype (no f32 copy)
    N = inp2d.shape[0]

    # Only for tiny inputs (N < 8) do we pad to satisfy the 8-sublane block
    # minimum; padded mask rows are 0 so the result is exact.
    if N < 8:
        pad = 8 - N
        inp2d = jnp.pad(inp2d, ((0, pad), (0, 0)))
        target = jnp.pad(target, ((0, pad), (0, 0)))
        mask2d = jnp.pad(mask2d, ((0, pad), (0, 0)))
    n_pad_rows = inp2d.shape[0]

    if row_tile is None:
        row_tile = _pick_row_tile(n_pad_rows, V, jnp.dtype(inp2d.dtype).itemsize)
    assert row_tile % 8 == 0, "row_tile must be a multiple of 8"

    num_tiles = pl.cdiv(n_pad_rows, row_tile)

    partials = pl.pallas_call(
        functools.partial(_lm_criterion_kernel, n_rows=N),
        out_shape=jax.ShapeDtypeStruct((num_tiles, 128), jnp.float32),
        grid_spec=pltpu.PrefetchScalarGridSpec(
            num_scalar_prefetch=0,
            grid=(num_tiles,),
            in_specs=[
                pl.BlockSpec((row_tile, V), lambda i: (i, 0)),
                pl.BlockSpec((row_tile, 1), lambda i: (i, 0)),
                pl.BlockSpec((row_tile, 1), lambda i: (i, 0)),
            ],
            out_specs=pl.BlockSpec((1, 128), lambda i: (i, 0)),
        ),
        compiler_params=pltpu.CompilerParams(
            # Each block writes its own output row -> no carried state -> the
            # grid can be split across TensorCores (v7x megacore).
            dimension_semantics=("parallel",),
        ),
    )(inp2d, target, mask2d)

    num = jnp.sum(partials[:, 0])          # tiny final reduce in JAX
    den = jnp.sum(mask2d)                  # denominator never needed the kernel
    return (num / den).astype(inp.dtype)


def _reference(inp, target, mask):
    B, T, V = inp.shape
    tgt = target[:, :T].reshape(-1)
    msk = mask[:, :T].reshape(-1).astype(jnp.float32)
    flat = inp.reshape(-1, V).astype(jnp.float32)
    gathered = jnp.take_along_axis(flat, tgt[:, None], axis=1)[:, 0]
    return jnp.sum(-gathered * msk) / jnp.sum(msk)


if __name__ == "__main__":
    key = jax.random.PRNGKey(0)
    B, T, T_tgt, V = 2, 8, 12, 32

    k1, k2, k3 = jax.random.split(key, 3)
    # input: log-probabilities (B, T, V)
    logits = jax.random.normal(k1, (B, T, V), dtype=jnp.float32)
    inp = jax.nn.log_softmax(logits, axis=-1)
    # target: int token ids (B, T_tgt); mask: float (B, T_tgt)
    target = jax.random.randint(k2, (B, T_tgt), 0, V, dtype=jnp.int32)
    mask = (jax.random.uniform(k3, (B, T_tgt)) > 0.3).astype(jnp.float32)
    mask = mask.at[0, 0].set(1.0)  # ensure non-zero mask sum

    # float32 path
    loss = language_model_criterion(inp, target, mask)
    loss = jax.block_until_ready(loss)
    ref = _reference(inp, target, mask)
    assert jnp.allclose(loss, ref, atol=1e-5, rtol=1e-5), (loss, ref)

    # bf16 path (input stays bf16 in HBM; kernel upcasts in VMEM)
    inp_bf16 = inp.astype(jnp.bfloat16)
    loss_bf = language_model_criterion(inp_bf16, target, mask)
    loss_bf = jax.block_until_ready(loss_bf)
    ref_bf = _reference(inp_bf16.astype(jnp.float32), target, mask)
    assert jnp.allclose(loss_bf.astype(jnp.float32), ref_bf, atol=5e-2, rtol=2e-2), (
        loss_bf, ref_bf)

    print("KERNEL_OK")
</pallas_src>

<mosaic_0001>
module attributes {stable_mosaic.version = 11 : i64} {
  func.func @_lm_criterion_kernel(%arg0: i32, %arg1: memref<16x32xf32, #tpu.memory_space<vmem>>, %arg2: memref<16x1xi32, #tpu.memory_space<vmem>>, %arg3: memref<16x1xf32, #tpu.memory_space<vmem>>, %arg4: memref<1x128xf32, #tpu.memory_space<vmem>>) attributes {dimension_semantics = [#tpu.dimension_semantics<parallel>], iteration_bounds = array<i64: 1>, scalar_prefetch = 0 : i64, scratch_operands = 0 : i64, tpu.core_type = #tpu.core_type<tc>, window_params = [{transform_indices = @transform_0, window_bounds = array<i64: 16, 32>}, {transform_indices = @transform_1, window_bounds = array<i64: 16, 1>}, {transform_indices = @transform_2, window_bounds = array<i64: 16, 1>}, {transform_indices = @transform_3, window_bounds = array<i64: 1, 128>}]} {
    %c0 = arith.constant 0 : index
    %c0_0 = arith.constant 0 : index
    %0 = vector.load %arg1[%c0, %c0_0] : memref<16x32xf32, #tpu.memory_space<vmem>>, vector<16x32xf32>
    %c0_1 = arith.constant 0 : index
    %c0_2 = arith.constant 0 : index
    %1 = vector.load %arg2[%c0_1, %c0_2] : memref<16x1xi32, #tpu.memory_space<vmem>>, vector<16x1xi32>
    %c0_3 = arith.constant 0 : index
    %c0_4 = arith.constant 0 : index
    %2 = vector.load %arg3[%c0_3, %c0_4] : memref<16x1xf32, #tpu.memory_space<vmem>>, vector<16x1xf32>
    %c16_i32 = arith.constant 16 : i32
    %3 = arith.muli %arg0, %c16_i32 : i32
    %4 = tpu.iota {dimensions = array<i32: 0>} : vector<16x1xi32>
    %5 = vector.broadcast %3 : i32 to vector<16x1xi32>
    %6 = arith.addi %5, %4 : vector<16x1xi32>
    %c16_i32_5 = arith.constant 16 : i32
    %7 = vector.broadcast %c16_i32_5 : i32 to vector<16x1xi32>
    %8 = arith.cmpi slt, %6, %7 : vector<16x1xi32>
    %9 = tpu.iota {dimensions = array<i32: 1>} : vector<1x32xi32>
    %10 = vector.broadcast %9 : vector<1x32xi32> to vector<16x32xi32>
    %11 = vector.broadcast %1 : vector<16x1xi32> to vector<16x32xi32>
    %12 = arith.cmpi eq, %10, %11 : vector<16x32xi32>
    %cst = arith.constant 0.000000e+00 : f32
    %13 = vector.broadcast %cst : f32 to vector<16x32xf32>
    %14 = arith.select %12, %0, %13 : vector<16x32xi1>, vector<16x32xf32>
    %cst_6 = arith.constant dense<0.000000e+00> : vector<16xf32>
    %15 = vector.multi_reduction <add>, %14, %cst_6 [1] : vector<16x32xf32> to vector<16xf32>
    %16 = vector.shape_cast %15 : vector<16xf32> to vector<16x1xf32>
    %cst_7 = arith.constant 0.000000e+00 : f32
    %17 = vector.broadcast %cst_7 : f32 to vector<16x1xf32>
    %18 = arith.subf %17, %16 : vector<16x1xf32>
    %19 = arith.mulf %18, %2 : vector<16x1xf32>
    %cst_8 = arith.constant 0.000000e+00 : f32
    %20 = vector.broadcast %cst_8 : f32 to vector<16x1xf32>
    %21 = arith.select %8, %19, %20 : vector<16x1xi1>, vector<16x1xf32>
    %cst_9 = arith.constant dense<0.000000e+00> : vector<1xf32>
    %22 = vector.multi_reduction <add>, %21, %cst_9 [0] : vector<16x1xf32> to vector<1xf32>
    %23 = vector.shape_cast %22 : vector<1xf32> to vector<1x1xf32>
    %24 = vector.shape_cast %23 : vector<1x1xf32> to vector<1x1xf32>
    %25 = vector.broadcast %24 : vector<1x1xf32> to vector<1x128xf32>
    %c0_10 = arith.constant 0 : index
    %c0_11 = arith.constant 0 : index
    %26 = vector.load %arg4[%c0_10, %c0_11] : memref<1x128xf32, #tpu.memory_space<vmem>>, vector<1x128xf32>
    tpu.vector_store %arg4[%c0_10, %c0_11], %25 {strides = array<i32>} : memref<1x128xf32, #tpu.memory_space<vmem>>, vector<1x128xf32>,
    return
  }
  func.func @transform_0(%arg0: i32) -> (i32, i32) {
    %c0_i32 = arith.constant 0 : i32
    %c0_i32_0 = arith.constant 0 : i32
    return %arg0, %c0_i32 : i32, i32
  }
  func.func @transform_1(%arg0: i32) -> (i32, i32) {
    %c0_i32 = arith.constant 0 : i32
    %c0_i32_0 = arith.constant 0 : i32
    return %arg0, %c0_i32 : i32, i32
  }
  func.func @transform_2(%arg0: i32) -> (i32, i32) {
    %c0_i32 = arith.constant 0 : i32
    %c0_i32_0 = arith.constant 0 : i32
    return %arg0, %c0_i32 : i32, i32
  }
  func.func @transform_3(%arg0: i32) -> (i32, i32) {
    %c0_i32 = arith.constant 0 : i32
    %c0_i32_0 = arith.constant 0 : i32
    return %arg0, %c0_i32 : i32, i32
  }
}

</mosaic_0001>

<llo_original>
// kernel: tpu_custom_call.1
$region0: #{tpu_custom_call.1}
  #allocation0 [shape = 'u32[]', space=smem, size = 0x4, offset = 0x4, fixed_abs, tag = 'smem constant byte address 0x4 - core index']
  #allocation1 [shape = 'u32[144,128]{1,0:T(1,128)}', space=vmem, size = 0x12000, scoped, tag = 'internal scratch']
  %s0 = inlined_call_operand.vmem [shape: f32[16,32], index: 0, kind: input, shape index: {}]
  %s1 = inlined_call_operand.vmem [shape: s32[16,1], index: 1, kind: input, shape index: {}]
  %s2 = inlined_call_operand.vmem [shape: f32[16,1], index: 2, kind: input, shape index: {}]
  %s3 = inlined_call_operand.hbm [shape: f32[1,128], index: 3, kind: output, shape index: {}]
  %s4 = sld [smem:[#allocation0]]
  $region22: #{tpu_custom_call.1} parent=0
    _
  %s6 = ssub.s32 1, %s4
  %s7 = scalar_select 0, %s6, %s4
  $region1: #{tpu_custom_call.1} parent=0
    #allocation2 [shape = 'u8[512]{0}', space=vmem, size = 0x400, scoped, tag = 'output window, operand 0, single buffered']
    #allocation3 [shape = 's32[1]{0}', space=sflag, size = 0x4, scoped, tag = 'scoped memory for tpu_custom_call.1']
    %8 = vsyncpa [#allocation3], 0
    // Predicated region
    $region2: #{tpu_custom_call.1} parent=1 // pred_check
      _
    $region3: #{tpu_custom_call.1} parent=1 // pred_check_branch
      %10 = sbr.rel (0) target = $region5
    $region4: #{tpu_custom_call.1} parent=1 // pred_region
      _
    $region5: #{tpu_custom_call.1} parent=1 // pred_fallthru
      _
    // Predicated region
    $region6: #{tpu_custom_call.1} parent=1 // pred_check
      _
    $region7: #{tpu_custom_call.1} parent=1 // pred_check_branch
      %12 = sbr.rel (0) target = $region9
    $region8: #{tpu_custom_call.1} parent=1 // pred_region
      _
    $region9: #{tpu_custom_call.1} parent=1 // pred_fallthru
      _
    // Predicated region
    $region10: #{tpu_custom_call.1} parent=1 // pred_check
      _
    $region11: #{tpu_custom_call.1} parent=1 // pred_check_branch
      %14 = sbr.rel (0) target = $region13
    $region12: #{tpu_custom_call.1} parent=1 // pred_region
      _
    $region13: #{tpu_custom_call.1} parent=1 // pred_fallthru
      _
    %v15 = vld [vmem:[%s0] sm:$0xff]
    %v16 = vld [vmem:[%s0 + $0x8] sm:$0xff]
    %v17 = vld [vmem:[%s1] sm:$0xff]
    %v18 = vld [vmem:[%s1 + $0x8] sm:$0xff]
    %v19 = vld [vmem:[%s2] sm:$0xff]
    %v20 = vld [vmem:[%s2 + $0x8] sm:$0xff]
    %s21 = smul.u32 0, 16
    %v22 = vlaneseq
    %v23 = vshrl.u32 %v22, 7
    %v24 = vadd.s32 %v23, 8
    %v25 = vstv %s21
    %v26 = vadd.s32 %v25, %v23
    %v27 = vadd.s32 %v25, %v24
    %vm28 = vcmp.lt.s32.totalorder %v26, 16
    %vm29 = vcmp.lt.s32.totalorder %v27, 16
    %v30 = vlaneseq
    %v31 = vand.u32 %v30, 127
    %32 = vset.pattern.permute.xlu0 0
    %33 = vperm.xlu0 %32, %v17
    %v34 = vpop.permute.xlu0 %33
    %35 = vset.pattern.permute.xlu0 0
    %36 = vperm.xlu0 %35, %v18
    %v37 = vpop.permute.xlu0 %36
    %vm38 = vcmp.eq.s32.totalorder %v31, %v34
    %vm39 = vcmp.eq.s32.totalorder %v31, %v37
    %v40 = vsel %vm38, %v15, 0.0
    %v41 = vsel %vm39, %v16, 0.0
    %vm42 = vcmask 261120
    %v43 = vsel %vm42, %v40, 0.0
    %44 = vadd.xlane.f32.xlu0 %v43
    %v45 = vpop.xlane.xlu0 %44
    %v46 = vsel %vm42, %v41, 0.0
    %47 = vadd.xlane.f32.xlu0 %v46
    %v48 = vpop.xlane.xlu0 %47
    %v49 = vsub.f32 0.0, %v45
    %v50 = vsub.f32 0.0, %v48
    %v51 = vmul.f32 %v49, %v19
    %v52 = vmul.f32 %v50, %v20
    %v53 = vsel %vm28, %v51, 0.0
    %v54 = vsel %vm29, %v52, 0.0
    %vm55 = vcmask 7168
    %v56 = vsel %vm55, %v53, 0.0
    %v57 = vsel %vm55, %v54, 0.0
    %v58 = vadd.f32 %v56, %v57
    %v59 = vrot.slane %v58, 4
    %v60 = vadd.f32 %v58, %v59
    %v61 = vrot.slane %v60, 2
    %v62 = vadd.f32 %v60, %v61
    %v63 = vrot.slane %v62, 1
    %v64 = vadd.f32 %v62, %v63
    %66 = vset.pattern.permute.xlu0 0
    %67 = vperm.xlu0 %66, %v64
    %v68 = vpop.permute.xlu0 %67
    %70 = vst [vmem:[#allocation2] sm:$0x1] %v68
    // Predicated region
    $region14: #{tpu_custom_call.1} parent=1 // pred_check
      _
    $region15: #{tpu_custom_call.1} parent=1 // pred_check_branch
      %72 = sbr.rel (0) target = $region17
    $region16: #{tpu_custom_call.1} parent=1 // pred_region
      %s74 = ssub.s32 16, 16
      %75 = vsyncadd [#allocation3], %s74
      %s77 = sshll.u32 [#allocation2], 4
      %s78 = int_to_ptr.vmem [resolvable:$true] %s77
      %80 = dma.vmem_to_hbm [thread:$0]  %s78, 16, %s3, [#allocation3]
    $region17: #{tpu_custom_call.1} parent=1 // pred_fallthru
      _
    // Predicated region
    $region18: #{tpu_custom_call.1} parent=1 // pred_check
      _
    $region19: #{tpu_custom_call.1} parent=1 // pred_check_branch
      %82 = sbr.rel (0) target = $region21
    $region20: #{tpu_custom_call.1} parent=1 // pred_region
      %83 = dma.done [#allocation3], 16
    $region21: #{tpu_custom_call.1} parent=1 // pred_fallthru
      _
    %84 = vsyncpa [#allocation3], 1

</llo_original>
